<compile_context>
chip_gen: v7x
topology: tpu7x:2x2x1
jax: 0.10.0
libtpu: 0.0.40
codegen_flags: <defaults>
</compile_context>

<pallas_src>
import functools
import numpy as np
import jax
import jax.numpy as jnp
from jax.experimental import pallas as pl
from jax.experimental.pallas import tpu as pltpu


# ----------------------------- synthetic config -----------------------------
class Config:
    hidden_size = 32
    num_prefixes = 4
    seq_length = 8
    position_dim = 12            # seq_length + num_prefixes
    gate_scale = 100.0
    scale_embeddings = 1.0
    restrict_prefixes = True
    use_einsum = True


DIN = 4
DOUT = 4
SHIFT_TOP = 0
MEMORY_INDEX = -1                # memory branch inactive (as in default module use)
PROJECTION_MATRIX = None         # projection branch inactive


# --------------------------- parameter construction -------------------------
def build_linear_forward_params(cfg, din, dout, shift_top):
    H = cfg.hidden_size
    P = cfg.num_prefixes
    S = cfg.seq_length
    PD = cfg.position_dim
    hd = P                                   # head_dim = num_prefixes
    NH = H // hd                             # num_attention_heads
    apw = din // hd                          # attnt_head_per_wt
    useful = apw * (dout // P)               # useful_attnt_heads
    extra = dout // hd                       # extra_heads
    nph = hd // P                            # num_partitions_head
    C = H // P                               # num_channels
    nwc = dout // P                          # num_wt_channels
    AH = H // dout                           # num_abs_heads
    shift_top_head = shift_top // dout

    # --- same assertions as the PyTorch __init__ (proj_conv2d branch) ---
    assert H % hd == 0 and H >= din * (dout // P)
    assert dout % P == 0 and din % hd == 0 and dout % hd == 0
    assert NH >= extra + useful and P <= hd and hd % P == 0
    assert H % dout == 0                     # proj_conv2d == True branch

    # --- raw weights, exactly as constructed in __init__ ---
    key_attn = np.zeros((NH, hd, hd), np.float32)
    key_attn[:useful] = np.eye(hd)
    query_attn_head = np.zeros((hd, NH, NH), np.float32)
    for i in range(dout // P):
        query_attn_head[:, i * apw:(i + 1) * apw, :apw] = np.eye(apw)
    value_attn = np.zeros((NH, hd, hd), np.float32)
    value_attn[useful:useful + extra] = np.eye(hd)

    query_pos = np.zeros((hd, PD), np.float32)
    query_pos[0, :S] = 1.0
    key_pos = np.zeros((hd, PD), np.float32)
    key_pos[:P, S:PD] = np.eye(P)
    value_pos = np.zeros((hd, PD), np.float32)
    value_pos[:P, S:PD] = np.eye(P)

    expand_ = np.zeros((3, 1, NH), np.float32)
    expand_[0, 0, useful:useful + extra] = 1.0
    expand_[1, 0, useful:useful + extra] = 1.0
    expand_[2, 0, :useful] = 1.0

    c_proj_init = np.zeros((P, C, C), np.float32)
    for i in range(nwc):
        for j in range(apw * nph):
            c_proj_init[:, i, i * apw * nph + j] = 1.0
        c_proj_init[:, nwc + i, nwc * apw * nph + i] = 1.0

    permutation_wt = np.zeros((AH, dout, dout), np.float32)
    for i in range(dout):
        desd_loc = (i % nwc) * P + i // nwc
        permutation_wt[0, i, desd_loc] = 1.0
    permutation_wt[1] = np.eye(dout)

    bias_add_wt = np.zeros((dout, AH, AH), np.float32)
    bias_add_wt[:, shift_top_head, 0:2] = 1.0

    w = np.zeros((1, 2 * H), np.float32)
    u = np.zeros((1, 2 * H), np.float32)
    v = np.zeros((1, 2 * PD), np.float32)
    w_bias = np.zeros(2, np.float32)
    u_bias = np.zeros(2, np.float32)
    v_bias = np.zeros(2, np.float32)
    v[0, S:PD] = cfg.gate_scale
    v[0, PD + S:2 * PD] = -cfg.gate_scale
    v_bias[1] += cfg.gate_scale

    # --- fold block-structured per-head / per-block maps into dense matrices ---
    Qc = np.zeros((H, H), np.float32)
    for h in range(NH):
        for d in range(hd):
            for h2 in range(NH):
                Qc[h * hd + d, h2 * hd + d] = query_attn_head[d, h, h2]
    Kc = np.zeros((H, H), np.float32)
    Vc = np.zeros((H, H), np.float32)
    for h in range(NH):
        Kc[h * hd:(h + 1) * hd, h * hd:(h + 1) * hd] = key_attn[h]
        Vc[h * hd:(h + 1) * hd, h * hd:(h + 1) * hd] = value_attn[h]

    # positional QKV maps (position_dim -> H), gated per-head by p_expand
    PQ = np.zeros((H, PD), np.float32)
    PK = np.zeros((H, PD), np.float32)
    PV = np.zeros((H, PD), np.float32)
    for h in range(NH):
        PQ[h * hd:(h + 1) * hd, :] = expand_[0, 0, h] * query_pos
        PK[h * hd:(h + 1) * hd, :] = expand_[1, 0, h] * key_pos
        PV[h * hd:(h + 1) * hd, :] = expand_[2, 0, h] * value_pos

    # output projection chain: c_proj -> permutation_conv -> bias_add_conv
    M1 = np.zeros((H, H), np.float32)        # c_proj, per-prefix channel mix
    for p in range(P):
        for co in range(C):
            for ci in range(C):
                M1[co * P + p, ci * P + p] = c_proj_init[p, co, ci]
    M2 = np.zeros((H, H), np.float32)        # permutation_conv (per abs-head)
    for a in range(AH):
        M2[a * dout:(a + 1) * dout, a * dout:(a + 1) * dout] = permutation_wt[a]
    M3 = np.zeros((H, H), np.float32)        # bias_add_conv (per dout index)
    for d in range(dout):
        for ao in range(AH):
            for ai in range(AH):
                M3[ao * dout + d, ai * dout + d] = bias_add_wt[d, ao, ai]
    M = M3 @ M2 @ M1

    # gate maps: two gate logits per token
    Gx = np.stack([w[0, :H], w[0, H:]], axis=1)                 # (H, 2)
    Go = np.stack([u[0, :H], u[0, H:]], axis=1)                 # (H, 2)
    Gp = np.stack([v[0, :PD], v[0, PD:]], axis=1)               # (PD, 2)
    gbias = (w_bias + u_bias + v_bias).reshape(1, 2)

    return dict(
        qcT=jnp.asarray(Qc.T), kcT=jnp.asarray(Kc.T), vcT=jnp.asarray(Vc.T),
        pqT=jnp.asarray(PQ.T), pkT=jnp.asarray(PK.T), pvT=jnp.asarray(PV.T),
        mT=jnp.asarray(M.T),
        gx=jnp.asarray(Gx), go=jnp.asarray(Go), gp=jnp.asarray(Gp),
        gbias=jnp.asarray(gbias),
    )


def pack_weights(params, cfg, matmul_dtype):
    """Fuse the many small weight matrices into wide MXU operands (exact)."""
    H = cfg.hidden_size
    hd = cfg.num_prefixes
    S = cfg.seq_length
    PD = cfg.position_dim

    # x-side: [Qc^T | Kc^T | Vc^T | gate_x] -> (H, 3H+2)   (98 <= 128 lanes)
    wx = jnp.concatenate(
        [params["qcT"], params["kcT"], params["vcT"], params["gx"]], axis=1)

    # pos-side (consumed OUTSIDE the kernel only):
    #   [PQ^T | PK^T | PV^T | gate_pos | prefix_indicator] -> (PD, 3H+3)
    prefix_col = jnp.zeros((PD, 1), jnp.float32).at[S:PD, 0].set(1.0)
    wp_ext = jnp.concatenate(
        [params["pqT"], params["pkT"], params["pvT"], params["gp"], prefix_col],
        axis=1).astype(jnp.float32)

    # output-side: [M^T | M^T @ gate_out] -> (H, H+2)
    #   (out_states @ Go == o @ (M^T @ Go), so the gate contribution folds in)
    wm = jnp.concatenate([params["mT"], params["mT"] @ params["go"]], axis=1)

    # block-diagonal per-head mask for the reassociated attention (constant)
    head_id = np.arange(H) // hd
    hmask = jnp.asarray((head_id[:, None] == head_id[None, :]).astype(np.float32))

    gbias = params["gbias"].reshape(1, 2).astype(jnp.float32)
    return wx.astype(matmul_dtype), wm.astype(matmul_dtype), hmask, wp_ext, gbias


# --------------------------------- kernel -----------------------------------
def linear_forward_kernel(x_ref, pb_ref, wx_ref, wm_ref, hm_ref, out_ref, *,
                          tokens_per_batch, matmul_dtype):
    R, H = x_ref.shape                      # (block_rows, hidden)
    T = tokens_per_batch
    bblk = R // T                           # batch elements per block
    md = matmul_dtype

    x2 = x_ref[...]                         # (R, H)
    pb = pb_ref[...]                        # (R, 3H+3) f32 positional bias + mask

    # Fused content projections + gate logits: ONE wide MXU matmul (K=H,
    # N=3H+2<=128).  Positional contribution + gate bias is a precomputed
    # f32 bias; the prefix key-mask is the last column of the same constant.
    a = jnp.dot(x2.astype(md), wx_ref[...],
                preferred_element_type=jnp.float32) + pb[:, 0:3 * H + 2]

    q2 = a[:, 0:H]
    k2 = a[:, H:2 * H] * pb[:, 3 * H + 2:3 * H + 3]   # prefix key-mask (from positions)
    v2 = a[:, 2 * H:3 * H]
    g_xp = a[:, 3 * H:3 * H + 2]                      # x/pos gate logits + gate bias

    # Per-head linear (no-softmax) attention, reassociated per batch element:
    #   o_b = q_b @ ((k_masked_b^T @ v_b) * head_blockdiag)
    # -> no per-head loop, no 4-wide lane slices, no concatenates.
    q3 = q2.reshape(bblk, T, H).astype(md)
    k3 = k2.reshape(bblk, T, H).astype(md)
    v3 = v2.reshape(bblk, T, H).astype(md)
    kv = jnp.einsum('bjc,bjd->bcd', k3, v3,
                    preferred_element_type=jnp.float32)          # (b, H, H)
    kv = kv * hm_ref[...]                                        # head block-diag
    o3 = jnp.einsum('bic,bcd->bid', q3, kv.astype(md),
                    preferred_element_type=jnp.float32)          # (b, T, H)
    o2 = o3.reshape(R, H)

    # Folded c_proj -> permutation_conv -> bias_add_conv, plus its gate term.
    y = jnp.dot(o2.astype(md), wm_ref[...],
                preferred_element_type=jnp.float32)              # (R, H+2)
    out_states = y[:, 0:H]

    # Gates (f32 VPU/EUP work on every chip generation):
    #   mix = (2*sigmoid(g1)-1)*hidden + (2*sigmoid(g2)-1)*output
    g = g_xp + y[:, H:H + 2]                                     # (R, 2)
    gs = 2.0 * jax.nn.sigmoid(g) - 1.0
    out2 = gs[:, 0:1] * x2.astype(jnp.float32) + gs[:, 1:2] * out_states
    out_ref[...] = out2.astype(out_ref.dtype)


# --------------------------------- wrapper -----------------------------------
def _default_block_b(B, T):
    """Batch-block heuristic.

    Targets ~512-2048 rows (block_b*T) per grid step to amortize the ~0.35 us
    per-step pipeline overhead, keeps block_b even so the 2-D row block is a
    multiple of 8 sublanes, and keeps the grid length even (>=2) when B allows
    so v7x's two TensorCores both get work.  Per-block VMEM at <=2048 rows is
    ~16 MiB (f32 incl. 128-lane padding) -- inside v7x's 32 MiB scoped default.
    """
    max_b = max(1, (2048 // max(T, 1)) // 2 * 2)
    target_b = max(2, (1024 // max(T, 1)) // 2 * 2)
    target_b = min(target_b, max_b)
    if B <= target_b:
        if B >= 4:
            bb = -(-B // 2)                  # split once -> even 2-step grid
            bb += bb % 2                     # even -> rows multiple of 8
            return bb
        return B                             # tiny B: one full-array block
    steps = -(-B // target_b)
    steps += steps % 2                       # even grid length for v7x
    bb = -(-B // steps)
    bb += bb % 2                             # even block_b
    return max(2, min(bb, max_b))


def linear_forward(hidden_states, position_embeddings, params, cfg, *,
                   block_b=None, matmul_dtype=jnp.bfloat16):
    assert hidden_states.ndim == 3
    B, T, H = hidden_states.shape
    W = 3 * H + 3

    wx, wm, hmask, wp_ext, gbias = pack_weights(params, cfg, matmul_dtype)

    # Positional contribution precomputed outside the kernel: positions are
    # one-hot and batch-invariant in TinT, so pos @ [PQ|PK|PV|Gp|prefix] is a
    # tiny (T, 3H+3) constant (removes one wide MXU matmul, the (R,98) add and
    # the whole (B,T,PD) DMA stream).
    pos = position_embeddings
    if pos.ndim == 3:
        # TODO(synk): assumes batch-invariant position embeddings (TinT driver).
        pos = pos[0]
    pb = pos.astype(jnp.float32) @ wp_ext                    # (T, 3H+3)
    pb = pb.at[:, 3 * H:3 * H + 2].add(gbias)                # fold gate bias
    if not cfg.restrict_prefixes:
        pb = pb.at[:, 3 * H + 2].set(1.0)                    # key mask disabled

    if block_b is None:
        block_b = _default_block_b(B, T)
    block_b = max(1, min(block_b, B))
    if block_b != B and (block_b * T) % 8 != 0:
        block_b += block_b % 2               # keep row blocks 8-sublane aligned
    block_rows = block_b * T
    grid = (pl.cdiv(B, block_b),)

    # Per-block positional bias (same for every block: blocks start at batch
    # boundaries).  Constant index_map -> DMA'd once, not per step.
    pb_block = jnp.tile(pb, (block_b, 1))                    # (block_rows, 3H+3)

    # 2-D I/O: (B*T, H) rows, blocked in multiples of T (and of 8 sublanes).
    x2 = hidden_states.reshape(B * T, H)

    kern = functools.partial(linear_forward_kernel,
                             tokens_per_batch=T, matmul_dtype=matmul_dtype)

    in_specs = [
        pl.BlockSpec((block_rows, H), lambda b: (b, 0)),     # hidden rows
        pl.BlockSpec((block_rows, W), lambda b: (0, 0)),     # positional bias (const)
        pl.BlockSpec(wx.shape, lambda b: (0, 0)),            # fused x-side weights
        pl.BlockSpec(wm.shape, lambda b: (0, 0)),            # fused output weights
        pl.BlockSpec(hmask.shape, lambda b: (0, 0)),         # head block-diag mask
    ]
    out_spec = pl.BlockSpec((block_rows, H), lambda b: (b, 0))

    out2 = pl.pallas_call(
        kern,
        out_shape=jax.ShapeDtypeStruct((B * T, H), hidden_states.dtype),
        grid=grid,
        in_specs=in_specs,
        out_specs=out_spec,
        compiler_params=pltpu.CompilerParams(dimension_semantics=("parallel",)),
    )(x2, pb_block, wx, wm, hmask)
    return out2.reshape(B, T, H)


# ------------------------------ pure-JAX reference ---------------------------
def reference_forward(hidden, pos, params, cfg):
    B, T, H = hidden.shape
    hd = cfg.num_prefixes
    NH = H // hd
    q = hidden @ params["qcT"] + pos @ params["pqT"]
    k = hidden @ params["kcT"] + pos @ params["pkT"]
    v = hidden @ params["vcT"] + pos @ params["pvT"]
    qh = q.reshape(B, T, NH, hd)
    kh = k.reshape(B, T, NH, hd)
    vh = v.reshape(B, T, NH, hd)
    s = jnp.einsum('bihd,bjhd->bhij', qh, kh)
    if cfg.restrict_prefixes:
        mask = (jnp.arange(T) < cfg.num_prefixes).astype(hidden.dtype)
        s = s * mask[None, None, None, :]
    o = jnp.einsum('bhij,bjhd->bihd', s, vh).reshape(B, T, H)
    out_states = o @ params["mT"]
    g = hidden @ params["gx"] + out_states @ params["go"] + pos @ params["gp"] + params["gbias"]
    gs = 2.0 * jax.nn.sigmoid(g) - 1.0
    return gs[..., 0:1] * hidden + gs[..., 1:2] * out_states


# ----------------------------------- main ------------------------------------
if __name__ == "__main__":
    cfg = Config()
    P, S, PD, H = cfg.num_prefixes, cfg.seq_length, cfg.position_dim, cfg.hidden_size
    T = P + S

    params = build_linear_forward_params(cfg, DIN, DOUT, SHIFT_TOP)
    key = jax.random.PRNGKey(0)

    # prefix tokens (first P) occupy positions [S, S+P); regular tokens [0, S)
    pos_idx = jnp.concatenate([jnp.arange(S, S + P), jnp.arange(0, S)])
    pos_onehot = jax.nn.one_hot(pos_idx, PD, dtype=jnp.float32)            # (T, PD)

    # --- small shape: B = 2 (single grid step) ---
    B = 2
    hidden_states = jax.random.normal(key, (B, T, H), dtype=jnp.float32)
    position_embeddings = jnp.broadcast_to(pos_onehot, (B, T, PD))
    ref = reference_forward(hidden_states, position_embeddings, params, cfg)

    # f32 MXU operands: strict functional check against the pure-JAX reference.
    out_f32 = linear_forward(hidden_states, position_embeddings, params, cfg,
                             matmul_dtype=jnp.float32)
    out_f32 = jax.block_until_ready(out_f32)
    np.testing.assert_allclose(np.asarray(out_f32), np.asarray(ref),
                               atol=1e-4, rtol=1e-4)

    # bf16 MXU operands (default; v6e/v7x fast path; f32 accumulation + gating).
    out_bf16 = linear_forward(hidden_states, position_embeddings, params, cfg)
    out_bf16 = jax.block_until_ready(out_bf16)
    np.testing.assert_allclose(np.asarray(out_bf16), np.asarray(ref),
                               atol=2e-1, rtol=5e-2)

    # --- B = 6: exercises the multi-step (even) grid and a partial tail block ---
    B2 = 6
    hidden2 = jax.random.normal(jax.random.PRNGKey(1), (B2, T, H), dtype=jnp.float32)
    pos2 = jnp.broadcast_to(pos_onehot, (B2, T, PD))
    ref2 = reference_forward(hidden2, pos2, params, cfg)
    out2 = linear_forward(hidden2, pos2, params, cfg, matmul_dtype=jnp.float32)
    out2 = jax.block_until_ready(out2)
    np.testing.assert_allclose(np.asarray(out2), np.asarray(ref2),
                               atol=1e-4, rtol=1e-4)

    print("KERNEL_OK")
</pallas_src>

<mosaic_0001>
module attributes {stable_mosaic.version = 11 : i64} {
  func.func @linear_forward_kernel(%arg0: i32, %arg1: memref<24x32xf32, #tpu.memory_space<vmem>>, %arg2: memref<24x99xf32, #tpu.memory_space<vmem>>, %arg3: memref<32x98xf32, #tpu.memory_space<vmem>>, %arg4: memref<32x34xf32, #tpu.memory_space<vmem>>, %arg5: memref<32x32xf32, #tpu.memory_space<vmem>>, %arg6: memref<24x32xf32, #tpu.memory_space<vmem>>) attributes {dimension_semantics = [#tpu.dimension_semantics<parallel>], iteration_bounds = array<i64: 1>, scalar_prefetch = 0 : i64, scratch_operands = 0 : i64, tpu.core_type = #tpu.core_type<tc>, window_params = [{transform_indices = @transform_0, window_bounds = array<i64: 24, 32>}, {pipeline_mode = #tpu.pipeline_mode<synchronous>, transform_indices = @transform_1, window_bounds = array<i64: 24, 99>}, {pipeline_mode = #tpu.pipeline_mode<synchronous>, transform_indices = @transform_2, window_bounds = array<i64: 32, 98>}, {pipeline_mode = #tpu.pipeline_mode<synchronous>, transform_indices = @transform_3, window_bounds = array<i64: 32, 34>}, {pipeline_mode = #tpu.pipeline_mode<synchronous>, transform_indices = @transform_4, window_bounds = array<i64: 32, 32>}, {transform_indices = @transform_5, window_bounds = array<i64: 24, 32>}]} {
    %c0 = arith.constant 0 : index
    %c0_0 = arith.constant 0 : index
    %0 = vector.load %arg1[%c0, %c0_0] : memref<24x32xf32, #tpu.memory_space<vmem>>, vector<24x32xf32>
    %c0_1 = arith.constant 0 : index
    %c0_2 = arith.constant 0 : index
    %1 = vector.load %arg2[%c0_1, %c0_2] : memref<24x99xf32, #tpu.memory_space<vmem>>, vector<24x99xf32>
    %c0_3 = arith.constant 0 : index
    %c0_4 = arith.constant 0 : index
    %2 = vector.load %arg3[%c0_3, %c0_4] : memref<32x98xf32, #tpu.memory_space<vmem>>, vector<32x98xf32>
    %cst = arith.constant dense<0.000000e+00> : vector<24x98xf32>
    %3 = tpu.matmul %0, %2, %cst {dimension_numbers = #tpu.dot_dimension_numbers<[1], [0], [0], [1], [0, 0, 1, 1], [], []>} : vector<24x32xf32>, vector<32x98xf32>, vector<24x98xf32> -> vector<24x98xf32>
    %4 = vector.extract_strided_slice %1 {offsets = [0, 0], sizes = [24, 98], strides = [1, 1]} : vector<24x99xf32> to vector<24x98xf32>
    %5 = arith.addf %3, %4 : vector<24x98xf32>
    %6 = vector.extract_strided_slice %5 {offsets = [0, 0], sizes = [24, 32], strides = [1, 1]} : vector<24x98xf32> to vector<24x32xf32>
    %7 = vector.extract_strided_slice %5 {offsets = [0, 32], sizes = [24, 32], strides = [1, 1]} : vector<24x98xf32> to vector<24x32xf32>
    %8 = vector.extract_strided_slice %1 {offsets = [0, 98], sizes = [24, 1], strides = [1, 1]} : vector<24x99xf32> to vector<24x1xf32>
    %9 = vector.broadcast %8 : vector<24x1xf32> to vector<24x32xf32>
    %10 = arith.mulf %7, %9 : vector<24x32xf32>
    %11 = vector.extract_strided_slice %5 {offsets = [0, 64], sizes = [24, 32], strides = [1, 1]} : vector<24x98xf32> to vector<24x32xf32>
    %12 = vector.extract_strided_slice %5 {offsets = [0, 96], sizes = [24, 2], strides = [1, 1]} : vector<24x98xf32> to vector<24x2xf32>
    %13 = vector.shape_cast %6 : vector<24x32xf32> to vector<2x12x32xf32>
    %14 = vector.shape_cast %10 : vector<24x32xf32> to vector<2x12x32xf32>
    %15 = vector.shape_cast %11 : vector<24x32xf32> to vector<2x12x32xf32>
    "tpu.trace_start"() <{level = 10 : i32, message = "bjc,bjd->bcd"}> : () -> ()
    %cst_5 = arith.constant dense<0.000000e+00> : vector<2x32x32xf32>
    %16 = tpu.matmul %14, %15, %cst_5 {dimension_numbers = #tpu.dot_dimension_numbers<[1], [1], [2], [2], [0, 0, 0, 2, 1, 2], [0], [0]>} : vector<2x12x32xf32>, vector<2x12x32xf32>, vector<2x32x32xf32> -> vector<2x32x32xf32>
    "tpu.trace_stop"() : () -> ()
    %c0_6 = arith.constant 0 : index
    %c0_7 = arith.constant 0 : index
    %17 = vector.load %arg5[%c0_6, %c0_7] : memref<32x32xf32, #tpu.memory_space<vmem>>, vector<32x32xf32>
    %18 = vector.shape_cast %17 : vector<32x32xf32> to vector<1x32x32xf32>
    %19 = vector.broadcast %18 : vector<1x32x32xf32> to vector<2x32x32xf32>
    %20 = arith.mulf %16, %19 : vector<2x32x32xf32>
    "tpu.trace_start"() <{level = 10 : i32, message = "bic,bcd->bid"}> : () -> ()
    %cst_8 = arith.constant dense<0.000000e+00> : vector<2x12x32xf32>
    %21 = tpu.matmul %13, %20, %cst_8 {dimension_numbers = #tpu.dot_dimension_numbers<[2], [1], [1], [2], [0, 0, 0, 1, 1, 2], [0], [0]>} : vector<2x12x32xf32>, vector<2x32x32xf32>, vector<2x12x32xf32> -> vector<2x12x32xf32>
    "tpu.trace_stop"() : () -> ()
    %22 = vector.shape_cast %21 : vector<2x12x32xf32> to vector<24x32xf32>
    %c0_9 = arith.constant 0 : index
    %c0_10 = arith.constant 0 : index
    %23 = vector.load %arg4[%c0_9, %c0_10] : memref<32x34xf32, #tpu.memory_space<vmem>>, vector<32x34xf32>
    %cst_11 = arith.constant dense<0.000000e+00> : vector<24x34xf32>
    %24 = tpu.matmul %22, %23, %cst_11 {dimension_numbers = #tpu.dot_dimension_numbers<[1], [0], [0], [1], [0, 0, 1, 1], [], []>} : vector<24x32xf32>, vector<32x34xf32>, vector<24x34xf32> -> vector<24x34xf32>
    %25 = vector.extract_strided_slice %24 {offsets = [0, 0], sizes = [24, 32], strides = [1, 1]} : vector<24x34xf32> to vector<24x32xf32>
    %26 = vector.extract_strided_slice %24 {offsets = [0, 32], sizes = [24, 2], strides = [1, 1]} : vector<24x34xf32> to vector<24x2xf32>
    %27 = arith.addf %12, %26 : vector<24x2xf32>
    %28 = arith.negf %27 : vector<24x2xf32>
    %29 = math.exp %28 : vector<24x2xf32>
    %cst_12 = arith.constant 1.000000e+00 : f32
    %30 = vector.broadcast %cst_12 : f32 to vector<24x2xf32>
    %31 = arith.addf %30, %29 : vector<24x2xf32>
    %32 = arith.divf %30, %31 : vector<24x2xf32>
    %cst_13 = arith.constant 2.000000e+00 : f32
    %33 = vector.broadcast %cst_13 : f32 to vector<24x2xf32>
    %34 = arith.mulf %33, %32 : vector<24x2xf32>
    %cst_14 = arith.constant 1.000000e+00 : f32
    %35 = vector.broadcast %cst_14 : f32 to vector<24x2xf32>
    %36 = arith.subf %34, %35 : vector<24x2xf32>
    %37 = vector.extract_strided_slice %36 {offsets = [0, 0], sizes = [24, 1], strides = [1, 1]} : vector<24x2xf32> to vector<24x1xf32>
    %38 = vector.broadcast %37 : vector<24x1xf32> to vector<24x32xf32>
    %39 = arith.mulf %38, %0 : vector<24x32xf32>
    %40 = vector.extract_strided_slice %36 {offsets = [0, 1], sizes = [24, 1], strides = [1, 1]} : vector<24x2xf32> to vector<24x1xf32>
    %41 = vector.broadcast %40 : vector<24x1xf32> to vector<24x32xf32>
    %42 = arith.mulf %41, %25 : vector<24x32xf32>
    %43 = arith.addf %39, %42 : vector<24x32xf32>
    %c0_15 = arith.constant 0 : index
    %c0_16 = arith.constant 0 : index
    %44 = vector.load %arg6[%c0_15, %c0_16] : memref<24x32xf32, #tpu.memory_space<vmem>>, vector<24x32xf32>
    tpu.vector_store %arg6[%c0_15, %c0_16], %43 {strides = array<i32>} : memref<24x32xf32, #tpu.memory_space<vmem>>, vector<24x32xf32>,
    return
  }
  func.func @transform_0(%arg0: i32) -> (i32, i32) {
    %c0_i32 = arith.constant 0 : i32
    %c0_i32_0 = arith.constant 0 : i32
    return %arg0, %c0_i32 : i32, i32
  }
  func.func @transform_1(%arg0: i32) -> (i32, i32) {
    %c0_i32 = arith.constant 0 : i32
    %c0_i32_0 = arith.constant 0 : i32
    %c0_i32_1 = arith.constant 0 : i32
    return %c0_i32, %c0_i32_0 : i32, i32
  }
  func.func @transform_2(%arg0: i32) -> (i32, i32) {
    %c0_i32 = arith.constant 0 : i32
    %c0_i32_0 = arith.constant 0 : i32
    %c0_i32_1 = arith.constant 0 : i32
    return %c0_i32, %c0_i32_0 : i32, i32
  }
  func.func @transform_3(%arg0: i32) -> (i32, i32) {
    %c0_i32 = arith.constant 0 : i32
    %c0_i32_0 = arith.constant 0 : i32
    %c0_i32_1 = arith.constant 0 : i32
    return %c0_i32, %c0_i32_0 : i32, i32
  }
  func.func @transform_4(%arg0: i32) -> (i32, i32) {
    %c0_i32 = arith.constant 0 : i32
    %c0_i32_0 = arith.constant 0 : i32
    %c0_i32_1 = arith.constant 0 : i32
    return %c0_i32, %c0_i32_0 : i32, i32
  }
  func.func @transform_5(%arg0: i32) -> (i32, i32) {
    %c0_i32 = arith.constant 0 : i32
    %c0_i32_0 = arith.constant 0 : i32
    return %arg0, %c0_i32 : i32, i32
  }
}

</mosaic_0001>

<llo_original>
// kernel: tpu_custom_call.1
$region0: #{tpu_custom_call.1}
  #allocation0 [shape = 'u32[]', space=smem, size = 0x4, offset = 0x4, fixed_abs, tag = 'smem constant byte address 0x4 - core index']
  #allocation1 [shape = 'u32[144,128]{1,0:T(1,128)}', space=vmem, size = 0x12000, scoped, tag = 'internal scratch']
  %s0 = inlined_call_operand.hbm [shape: f32[24,32], index: 0, kind: input, shape index: {}]
  %s1 = inlined_call_operand.hbm [shape: f32[24,99], index: 1, kind: input, shape index: {}]
  %s2 = inlined_call_operand.hbm [shape: f32[32,98], index: 2, kind: input, shape index: {}]
  %s3 = inlined_call_operand.hbm [shape: f32[32,34], index: 3, kind: input, shape index: {}]
  %s4 = inlined_call_operand.hbm [shape: f32[32,32], index: 4, kind: input, shape index: {}]
  %s5 = inlined_call_operand.hbm [shape: f32[24,32], index: 5, kind: output, shape index: {}]
  %s6 = sld [smem:[#allocation0]]
  $region50: #{tpu_custom_call.1} parent=0
    _
  %s8 = ssub.s32 1, %s6
  %s9 = scalar_select 0, %s8, %s6
  $region1: #{tpu_custom_call.1} parent=0
    #allocation2 [shape = 'u8[12288]{0}', space=vmem, size = 0x3000, scoped, tag = 'input window, operand 0, single buffered']
    #allocation3 [shape = 's32[1]{0}', space=sflag, size = 0x4, scoped, tag = 'scoped memory for tpu_custom_call.1']
    #allocation4 [shape = 's32[1]{0}', space=sflag, size = 0x4, scoped, tag = 'scoped memory for tpu_custom_call.1']
    #allocation5 [shape = 'u8[12288]{0}', space=vmem, size = 0x3000, scoped, tag = 'input window, operand 1, single buffered']
    #allocation6 [shape = 's32[1]{0}', space=sflag, size = 0x4, scoped, tag = 'scoped memory for tpu_custom_call.1']
    #allocation7 [shape = 'u8[16384]{0}', space=vmem, size = 0x4000, scoped, tag = 'input window, operand 2, single buffered']
    #allocation8 [shape = 'u8[16384]{0}', space=vmem, size = 0x4000, scoped, tag = 'input window, operand 3, single buffered']
    #allocation9 [shape = 's32[1]{0}', space=sflag, size = 0x4, scoped, tag = 'scoped memory for tpu_custom_call.1']
    #allocation10 [shape = 'u8[16384]{0}', space=vmem, size = 0x4000, scoped, tag = 'input window, operand 4, single buffered']
    #allocation11 [shape = 'u8[12288]{0}', space=vmem, size = 0x3000, scoped, tag = 'output window, operand 0, single buffered']
    %10 = vsyncpa [#allocation3], 0
    %11 = vsyncpa [#allocation6], 0
    %12 = vsyncpa [#allocation9], 0
    %13 = vsyncpa [#allocation4], 0
    // Predicated region
    $region2: #{tpu_custom_call.1} parent=1 // pred_check
      _
    $region3: #{tpu_custom_call.1} parent=1 // pred_check_branch
      %15 = sbr.rel (0) target = $region5
    $region4: #{tpu_custom_call.1} parent=1 // pred_region
      %s17 = ssub.s32 384, 384
      %18 = vsyncadd [#allocation3], %s17
      %s19 = sshll.u32 [#allocation2], 4
      %s20 = int_to_ptr.vmem [resolvable:$true] %s19
      %25 = dma.hbm_to_vmem [thread:$0]  %s0, 384, %s20, [#allocation3], 128, 128, 8
    $region5: #{tpu_custom_call.1} parent=1 // pred_fallthru
      _
    // Predicated region
    $region6: #{tpu_custom_call.1} parent=1 // pred_check
      _
    $region7: #{tpu_custom_call.1} parent=1 // pred_check_branch
      %27 = sbr.rel (0) target = $region9
    $region8: #{tpu_custom_call.1} parent=1 // pred_region
      %s29 = ssub.s32 384, 384
      %30 = vsyncadd [#allocation6], %s29
      %s31 = sshll.u32 [#allocation5], 4
      %s32 = int_to_ptr.vmem [resolvable:$true] %s31
      %37 = dma.hbm_to_vmem [thread:$0]  %s1, 384, %s32, [#allocation6], 128, 128, 8
    $region9: #{tpu_custom_call.1} parent=1 // pred_fallthru
      _
    // Predicated region
    $region10: #{tpu_custom_call.1} parent=1 // pred_check
      _
    $region11: #{tpu_custom_call.1} parent=1 // pred_check_branch
      %39 = sbr.rel (0) target = $region13
    $region12: #{tpu_custom_call.1} parent=1 // pred_region
      %s41 = ssub.s32 512, 512
      %42 = vsyncadd [#allocation6], %s41
      %s43 = sshll.u32 [#allocation7], 4
      %s44 = int_to_ptr.vmem [resolvable:$true] %s43
      %49 = dma.hbm_to_vmem [thread:$0]  %s2, 512, %s44, [#allocation6], 128, 128, 8
    $region13: #{tpu_custom_call.1} parent=1 // pred_fallthru
      _
    // Predicated region
    $region14: #{tpu_custom_call.1} parent=1 // pred_check
      _
    $region15: #{tpu_custom_call.1} parent=1 // pred_check_branch
      %51 = sbr.rel (0) target = $region17
    $region16: #{tpu_custom_call.1} parent=1 // pred_region
      %s53 = ssub.s32 512, 512
      %54 = vsyncadd [#allocation9], %s53
      %s55 = sshll.u32 [#allocation8], 4
      %s56 = int_to_ptr.vmem [resolvable:$true] %s55
      %61 = dma.hbm_to_vmem [thread:$0]  %s3, 512, %s56, [#allocation9], 128, 128, 8
    $region17: #{tpu_custom_call.1} parent=1 // pred_fallthru
      _
    // Predicated region
    $region18: #{tpu_custom_call.1} parent=1 // pred_check
      _
    $region19: #{tpu_custom_call.1} parent=1 // pred_check_branch
      %63 = sbr.rel (0) target = $region21
    $region20: #{tpu_custom_call.1} parent=1 // pred_region
      %s65 = ssub.s32 512, 512
      %66 = vsyncadd [#allocation9], %s65
      %s67 = sshll.u32 [#allocation10], 4
      %s68 = int_to_ptr.vmem [resolvable:$true] %s67
      %73 = dma.hbm_to_vmem [thread:$0]  %s4, 512, %s68, [#allocation9], 128, 128, 8
    $region21: #{tpu_custom_call.1} parent=1 // pred_fallthru
      _
    // Predicated region
    $region22: #{tpu_custom_call.1} parent=1 // pred_check
      _
    $region23: #{tpu_custom_call.1} parent=1 // pred_check_branch
      %75 = sbr.rel (0) target = $region25
    $region24: #{tpu_custom_call.1} parent=1 // pred_region
      %76 = dma.done [#allocation3], 384
    $region25: #{tpu_custom_call.1} parent=1 // pred_fallthru
      _
    // Predicated region
    $region26: #{tpu_custom_call.1} parent=1 // pred_check
      _
    $region27: #{tpu_custom_call.1} parent=1 // pred_check_branch
      %78 = sbr.rel (0) target = $region29
    $region28: #{tpu_custom_call.1} parent=1 // pred_region
      %79 = dma.done [#allocation6], 384
    $region29: #{tpu_custom_call.1} parent=1 // pred_fallthru
      _
    // Predicated region
    $region30: #{tpu_custom_call.1} parent=1 // pred_check
      _
    $region31: #{tpu_custom_call.1} parent=1 // pred_check_branch
      %81 = sbr.rel (0) target = $region33
    $region32: #{tpu_custom_call.1} parent=1 // pred_region
      %82 = dma.done [#allocation6], 512
    $region33: #{tpu_custom_call.1} parent=1 // pred_fallthru
      _
    // Predicated region
    $region34: #{tpu_custom_call.1} parent=1 // pred_check
      _
    $region35: #{tpu_custom_call.1} parent=1 // pred_check_branch
      %84 = sbr.rel (0) target = $region37
    $region36: #{tpu_custom_call.1} parent=1 // pred_region
      %85 = dma.done [#allocation9], 512
    $region37: #{tpu_custom_call.1} parent=1 // pred_fallthru
      _
    // Predicated region
    $region38: #{tpu_custom_call.1} parent=1 // pred_check
      _
    $region39: #{tpu_custom_call.1} parent=1 // pred_check_branch
      %87 = sbr.rel (0) target = $region41
    $region40: #{tpu_custom_call.1} parent=1 // pred_region
      %88 = dma.done [#allocation9], 512
    $region41: #{tpu_custom_call.1} parent=1 // pred_fallthru
      _
    %v89 = vld [vmem:[#allocation2] sm:$0xff]
    %v90 = vld [vmem:[#allocation2 + $0x8] sm:$0xff]
    %v91 = vld [vmem:[#allocation2 + $0x10] sm:$0xff]
    %v92 = vld [vmem:[#allocation5] sm:$0xff]
    %v93 = vld [vmem:[#allocation5 + $0x8] sm:$0xff]
    %v94 = vld [vmem:[#allocation5 + $0x10] sm:$0xff]
    %v95 = vld [vmem:[#allocation7] sm:$0xff]
    %v96 = vld [vmem:[#allocation7 + $0x8] sm:$0xff]
    %v97 = vld [vmem:[#allocation7 + $0x10] sm:$0xff]
    %v98 = vld [vmem:[#allocation7 + $0x18] sm:$0xff]
    %vm99 = vcmask 261120
    %v101 = vsel %vm99, %v89, 0
    %v104 = vsel %vm99, %v90, 0
    %v107 = vsel %vm99, %v91, 0
    %109 = vmatprep.subr.mxu0 0.0
    %110 = vmatpush1.msra.mxu0 %v95
    %111 = vmatprep.subr.mxu0 0.0
    %112 = vmatpush1.msra.mxu0 %v96
    %113 = vmatprep.subr.mxu0 0.0
    %114 = vmatpush1.msra.mxu0 %v97
    %115 = vmatprep.subr.mxu0 0.0
    %116 = vmatpush1.msra.mxu0 %v98
    %117 = vmatprep.subr.mxu0 0.0
    %118 = vmatpush1.msra.mxu0 0.0
    %119 = vmatprep.subr.mxu0 0.0
    %120 = vmatpush1.msra.mxu0 0.0
    %121 = vmatprep.subr.mxu0 0.0
    %122 = vmatpush1.msra.mxu0 0.0
    %123 = vmatprep.subr.mxu0 0.0
    %124 = vmatpush1.msra.mxu0 0.0
    %125 = vmatprep.subr.mxu0 0.0
    %126 = vmatpush1.msra.mxu0 0.0
    %127 = vmatprep.subr.mxu0 0.0
    %128 = vmatpush1.msra.mxu0 0.0
    %129 = vmatprep.subr.mxu0 0.0
    %130 = vmatpush1.msra.mxu0 0.0
    %131 = vmatprep.subr.mxu0 0.0
    %132 = vmatpush1.msra.mxu0 0.0
    %133 = vmatprep.subr.mxu0 0.0
    %134 = vmatpush1.msra.mxu0 0.0
    %135 = vmatprep.subr.mxu0 0.0
    %136 = vmatpush1.msra.mxu0 0.0
    %137 = vmatprep.subr.mxu0 0.0
    %138 = vmatpush1.msra.mxu0 0.0
    %139 = vmatprep.subr.mxu0 0.0
    %140 = vmatpush1.msra.mxu0 0.0
    %141 = vmatprep.subr.mxu0 0.0
    %142 = vmatpush1.msra.mxu0 0.0
    %143 = vmatprep.subr.mxu0 0.0
    %144 = vmatpush1.msra.mxu0 0.0
    %145 = vmatprep.subr.mxu0 0.0
    %146 = vmatpush1.msra.mxu0 0.0
    %147 = vmatprep.subr.mxu0 0.0
    %148 = vmatpush1.msra.mxu0 0.0
    %149 = vmatprep.subr.mxu0 0.0
    %150 = vmatpush1.msra.mxu0 0.0
    %151 = vmatprep.subr.mxu0 0.0
    %152 = vmatpush1.msra.mxu0 0.0
    %153 = vmatprep.subr.mxu0 0.0
    %154 = vmatpush1.msra.mxu0 0.0
    %155 = vmatprep.subr.mxu0 0.0
    %156 = vmatpush1.msra.mxu0 0.0
    %157 = vmatprep.subr.mxu0 0.0
    %158 = vmatpush1.msra.mxu0 0.0
    %159 = vmatprep.subr.mxu0 0.0
    %160 = vmatpush1.msra.mxu0 0.0
    %161 = vmatprep.subr.mxu0 0.0
    %162 = vmatpush1.msra.mxu0 0.0
    %163 = vmatprep.subr.mxu0 0.0
    %164 = vmatpush1.msra.mxu0 0.0
    %165 = vmatprep.subr.mxu0 0.0
    %166 = vmatpush1.msra.mxu0 0.0
    %167 = vmatprep.subr.mxu0 0.0
    %168 = vmatpush1.msra.mxu0 0.0
    %169 = vmatprep.subr.mxu0 0.0
    %170 = vmatpush1.msra.mxu0 0.0
    %171 = vmatprep.subr.mxu0 0.0
    %172 = vmatpush1.msra.mxu0 0.0
    %173 = vmatprep.mubr.f32.mxu0 0.0
    %174 = vmatmul.mubr.f32.gmra.mrb[0].mxu0 %v101
    %v175 = vpop.f32.mrb[0].mxu0
    %v176 = vadd.f32 %v92, %v175
    %v177 = vpop.f32.mrb[0].mxu0
    %178 = vmatprep.mubr.f32.mxu0 0.0
    %179 = vmatmul.mubr.f32.gmra.mrb[0].mxu0 %v104
    %v180 = vpop.f32.mrb[0].mxu0
    %v181 = vadd.f32 %v93, %v180
    %v182 = vpop.f32.mrb[0].mxu0
    %183 = vmatprep.mubr.f32.mxu0 0.0
    %184 = vmatmul.mubr.f32.gmra.mrb[0].mxu0 %v107
    %v185 = vpop.f32.mrb[0].mxu0
    %v186 = vadd.f32 %v94, %v185
    %v187 = vpop.f32.mrb[0].mxu0
    %188 = vdwg.mxu0
    %190 = vset.pattern.permute.xlu0 98
    %191 = vperm.xlu0 %190, %v92
    %v192 = vpop.permute.xlu0 %191
    %195 = vset.pattern.permute.xlu0 98
    %196 = vperm.xlu0 %195, %v93
    %v197 = vpop.permute.xlu0 %196
    %200 = vset.pattern.permute.xlu0 98
    %201 = vperm.xlu0 %200, %v94
    %v202 = vpop.permute.xlu0 %201
    %v204 = vmul.f32 %v176, %v192
    %v205 = vmul.f32 %v181, %v197
    %v206 = vmul.f32 %v186, %v202
    %v210 = vcombine.high %v176, %v176
    %v211 = vcombine.high %v181, %v181
    %v212 = vcombine.high %v186, %v186
    %v216 = vcombine.high %v204, %v204
    %v217 = vcombine.high %v205, %v205
    %v218 = vcombine.high %v206, %v206
    %v219 = vcombine.low %v204, %v216
    %220 = vrot.lane.b32.xlu0 %v219, 96
    %v221 = vpop.permute.xlu0 %220
    %222 = vrot.lane.b32.xlu0 %v205, 96
    %v223 = vpop.permute.xlu0 %222
    %226 = vxpose.xlu0.b32.start [1/16] %v221, 128
    %227 = vxpose.xlu0.b32.cont [2/16] %v223, 128
    %228 = vxpose.xlu0.b32.cont [3/16] 0.0, 128
    %229 = vxpose.xlu0.b32.cont [4/16] 0.0, 128
    %230 = vxpose.xlu0.b32.cont [5/16] 0.0, 128
    %231 = vxpose.xlu0.b32.cont [6/16] 0.0, 128
    %232 = vxpose.xlu0.b32.cont [7/16] 0.0, 128
    %233 = vxpose.xlu0.b32.cont [8/16] 0.0, 128
    %234 = vxpose.xlu0.b32.cont [9/16] 0.0, 128
    %235 = vxpose.xlu0.b32.cont [10/16] 0.0, 128
    %236 = vxpose.xlu0.b32.cont [11/16] 0.0, 128
    %237 = vxpose.xlu0.b32.cont [12/16] 0.0, 128
    %238 = vxpose.xlu0.b32.cont [13/16] 0.0, 128
    %239 = vxpose.xlu0.b32.cont [14/16] 0.0, 128
    %240 = vxpose.xlu0.b32.cont [15/16] 0.0, 128
    %241 = vxpose.xlu0.b32.end [16/16] 0.0, 128
    %v242 = vpop.trf.xlu0
    %v243 = vpop.trf.xlu0
    %v244 = vpop.trf.xlu0
    %v245 = vpop.trf.xlu0
    %v246 = vpop.trf.xlu0
    %v247 = vpop.trf.xlu0
    %v248 = vpop.trf.xlu0
    %v249 = vpop.trf.xlu0
    %v250 = vpop.trf.xlu0
    %v251 = vpop.trf.xlu0
    %v252 = vpop.trf.xlu0
    %v253 = vpop.trf.xlu0
    %v254 = vpop.trf.xlu0
    %v255 = vpop.trf.xlu0
    %v256 = vpop.trf.xlu0
    %v257 = vpop.trf.xlu0
    %v258 = vcombine.low %v176, %v210
    %259 = vrot.lane.b32.xlu0 %v258, 64
    %v260 = vpop.permute.xlu0 %259
    %261 = vrot.lane.b32.xlu0 %v181, 64
    %v262 = vpop.permute.xlu0 %261
    %vm264 = vcmask 97280
    %v266 = vsel %vm264, %v242, 0
    %v269 = vsel %vm264, %v243, 0
    %v272 = vsel %vm264, %v244, 0
    %v275 = vsel %vm264, %v245, 0
    %vm277 = vcmask 1043456
    %v278 = vsel %vm277, %v262, 0
    %280 = vmatprep.subr.mxu0 0.0
    %281 = vmatpush1.msra.mxu0 %v260
    %282 = vmatprep.subr.mxu0 0.0
    %283 = vmatpush1.msra.mxu0 %v278
    %284 = vmatprep.subr.mxu0 0.0
    %285 = vmatpush1.msra.mxu0 0.0
    %286 = vmatprep.subr.mxu0 0.0
    %287 = vmatpush1.msra.mxu0 0.0
    %288 = vmatprep.subr.mxu0 0.0
    %289 = vmatpush1.msra.mxu0 0.0
    %290 = vmatprep.subr.mxu0 0.0
    %291 = vmatpush1.msra.mxu0 0.0
    %292 = vmatprep.subr.mxu0 0.0
    %293 = vmatpush1.msra.mxu0 0.0
    %294 = vmatprep.subr.mxu0 0.0
    %295 = vmatpush1.msra.mxu0 0.0
    %296 = vmatprep.subr.mxu0 0.0
    %297 = vmatpush1.msra.mxu0 0.0
    %298 = vmatprep.subr.mxu0 0.0
    %299 = vmatpush1.msra.mxu0 0.0
    %300 = vmatprep.subr.mxu0 0.0
    %301 = vmatpush1.msra.mxu0 0.0
    %302 = vmatprep.subr.mxu0 0.0
    %303 = vmatpush1.msra.mxu0 0.0
    %304 = vmatprep.subr.mxu0 0.0
    %305 = vmatpush1.msra.mxu0 0.0
    %306 = vmatprep.subr.mxu0 0.0
    %307 = vmatpush1.msra.mxu0 0.0
    %308 = vmatprep.subr.mxu0 0.0
    %309 = vmatpush1.msra.mxu0 0.0
    %310 = vmatprep.subr.mxu0 0.0
    %311 = vmatpush1.msra.mxu0 0.0
    %312 = vmatprep.subr.mxu0 0.0
    %313 = vmatpush1.msra.mxu0 0.0
    %314 = vmatprep.subr.mxu0 0.0
    %315 = vmatpush1.msra.mxu0 0.0
    %316 = vmatprep.subr.mxu0 0.0
    %317 = vmatpush1.msra.mxu0 0.0
    %318 = vmatprep.subr.mxu0 0.0
    %319 = vmatpush1.msra.mxu0 0.0
    %320 = vmatprep.subr.mxu0 0.0
    %321 = vmatpush1.msra.mxu0 0.0
    %322 = vmatprep.subr.mxu0 0.0
    %323 = vmatpush1.msra.mxu0 0.0
    %324 = vmatprep.subr.mxu0 0.0
    %325 = vmatpush1.msra.mxu0 0.0
    %326 = vmatprep.subr.mxu0 0.0
    %327 = vmatpush1.msra.mxu0 0.0
    %328 = vmatprep.subr.mxu0 0.0
    %329 = vmatpush1.msra.mxu0 0.0
    %330 = vmatprep.subr.mxu0 0.0
    %331 = vmatpush1.msra.mxu0 0.0
    %332 = vmatprep.subr.mxu0 0.0
    %333 = vmatpush1.msra.mxu0 0.0
    %334 = vmatprep.subr.mxu0 0.0
    %335 = vmatpush1.msra.mxu0 0.0
    %336 = vmatprep.subr.mxu0 0.0
    %337 = vmatpush1.msra.mxu0 0.0
    %338 = vmatprep.subr.mxu0 0.0
    %339 = vmatpush1.msra.mxu0 0.0
    %340 = vmatprep.subr.mxu0 0.0
    %341 = vmatpush1.msra.mxu0 0.0
    %342 = vmatprep.subr.mxu0 0.0
    %343 = vmatpush1.msra.mxu0 0.0
    %344 = vmatprep.mubr.f32.mxu0 0.0
    %345 = vmatmul.mubr.f32.gmra.mrb[0].mxu0 %v266
    %v346 = vpop.f32.mrb[0].mxu0
    %v347 = vadd.f32 0.0, %v346
    %v348 = vpop.f32.mrb[0].mxu0
    %349 = vmatprep.mubr.f32.mxu0 0.0
    %350 = vmatmul.mubr.f32.gmra.mrb[0].mxu0 %v269
    %v351 = vpop.f32.mrb[0].mxu0
    %v352 = vadd.f32 0.0, %v351
    %v353 = vpop.f32.mrb[0].mxu0
    %354 = vmatprep.mubr.f32.mxu0 0.0
    %355 = vmatmul.mubr.f32.gmra.mrb[0].mxu0 %v272
    %v356 = vpop.f32.mrb[0].mxu0
    %v357 = vadd.f32 0.0, %v356
    %v358 = vpop.f32.mrb[0].mxu0
    %359 = vmatprep.mubr.f32.mxu0 0.0
    %360 = vmatmul.mubr.f32.gmra.mrb[0].mxu0 %v275
    %v361 = vpop.f32.mrb[0].mxu0
    %v362 = vadd.f32 0.0, %v361
    %v363 = vpop.f32.mrb[0].mxu0
    %364 = vdwg.mxu0
    %v365 = vcombine.low %v217, %v206
    %366 = vrot.lane.b32.xlu0 %v365, 96
    %v367 = vpop.permute.xlu0 %366
    %368 = vrot.lane.b32.xlu0 %v218, 96
    %v369 = vpop.permute.xlu0 %368
    %372 = vxpose.xlu0.b32.start [1/16] %v367, 128
    %373 = vxpose.xlu0.b32.cont [2/16] %v369, 128
    %374 = vxpose.xlu0.b32.cont [3/16] 0.0, 128
    %375 = vxpose.xlu0.b32.cont [4/16] 0.0, 128
    %376 = vxpose.xlu0.b32.cont [5/16] 0.0, 128
    %377 = vxpose.xlu0.b32.cont [6/16] 0.0, 128
    %378 = vxpose.xlu0.b32.cont [7/16] 0.0, 128
    %379 = vxpose.xlu0.b32.cont [8/16] 0.0, 128
    %380 = vxpose.xlu0.b32.cont [9/16] 0.0, 128
    %381 = vxpose.xlu0.b32.cont [10/16] 0.0, 128
    %382 = vxpose.xlu0.b32.cont [11/16] 0.0, 128
    %383 = vxpose.xlu0.b32.cont [12/16] 0.0, 128
    %384 = vxpose.xlu0.b32.cont [13/16] 0.0, 128
    %385 = vxpose.xlu0.b32.cont [14/16] 0.0, 128
    %386 = vxpose.xlu0.b32.cont [15/16] 0.0, 128
    %387 = vxpose.xlu0.b32.end [16/16] 0.0, 128
    %v388 = vpop.trf.xlu0
    %v389 = vpop.trf.xlu0
    %v390 = vpop.trf.xlu0
    %v391 = vpop.trf.xlu0
    %v392 = vpop.trf.xlu0
    %v393 = vpop.trf.xlu0
    %v394 = vpop.trf.xlu0
    %v395 = vpop.trf.xlu0
    %v396 = vpop.trf.xlu0
    %v397 = vpop.trf.xlu0
    %v398 = vpop.trf.xlu0
    %v399 = vpop.trf.xlu0
    %v400 = vpop.trf.xlu0
    %v401 = vpop.trf.xlu0
    %v402 = vpop.trf.xlu0
    %v403 = vpop.trf.xlu0
    %v404 = vcombine.low %v211, %v186
    %405 = vrot.lane.b32.xlu0 %v404, 64
    %v406 = vpop.permute.xlu0 %405
    %407 = vrot.lane.b32.xlu0 %v212, 64
    %v408 = vpop.permute.xlu0 %407
    %v411 = vsel %vm264, %v388, 0
    %v414 = vsel %vm264, %v389, 0
    %v417 = vsel %vm264, %v390, 0
    %v420 = vsel %vm264, %v391, 0
    %v422 = vsel %vm277, %v408, 0
    %424 = vmatprep.subr.mxu0 0.0
    %425 = vmatpush1.msra.mxu0 %v406
    %426 = vmatprep.subr.mxu0 0.0
    %427 = vmatpush1.msra.mxu0 %v422
    %428 = vmatprep.subr.mxu0 0.0
    %429 = vmatpush1.msra.mxu0 0.0
    %430 = vmatprep.subr.mxu0 0.0
    %431 = vmatpush1.msra.mxu0 0.0
    %432 = vmatprep.subr.mxu0 0.0
    %433 = vmatpush1.msra.mxu0 0.0
    %434 = vmatprep.subr.mxu0 0.0
    %435 = vmatpush1.msra.mxu0 0.0
    %436 = vmatprep.subr.mxu0 0.0
    %437 = vmatpush1.msra.mxu0 0.0
    %438 = vmatprep.subr.mxu0 0.0
    %439 = vmatpush1.msra.mxu0 0.0
    %440 = vmatprep.subr.mxu0 0.0
    %441 = vmatpush1.msra.mxu0 0.0
    %442 = vmatprep.subr.mxu0 0.0
    %443 = vmatpush1.msra.mxu0 0.0
    %444 = vmatprep.subr.mxu0 0.0
    %445 = vmatpush1.msra.mxu0 0.0
    %446 = vmatprep.subr.mxu0 0.0
    %447 = vmatpush1.msra.mxu0 0.0
    %448 = vmatprep.subr.mxu0 0.0
    %449 = vmatpush1.msra.mxu0 0.0
    %450 = vmatprep.subr.mxu0 0.0
    %451 = vmatpush1.msra.mxu0 0.0
    %452 = vmatprep.subr.mxu0 0.0
    %453 = vmatpush1.msra.mxu0 0.0
    %454 = vmatprep.subr.mxu0 0.0
    %455 = vmatpush1.msra.mxu0 0.0
    %456 = vmatprep.subr.mxu0 0.0
    %457 = vmatpush1.msra.mxu0 0.0
    %458 = vmatprep.subr.mxu0 0.0
    %459 = vmatpush1.msra.mxu0 0.0
    %460 = vmatprep.subr.mxu0 0.0
    %461 = vmatpush1.msra.mxu0 0.0
    %462 = vmatprep.subr.mxu0 0.0
    %463 = vmatpush1.msra.mxu0 0.0
    %464 = vmatprep.subr.mxu0 0.0
    %465 = vmatpush1.msra.mxu0 0.0
    %466 = vmatprep.subr.mxu0 0.0
    %467 = vmatpush1.msra.mxu0 0.0
    %468 = vmatprep.subr.mxu0 0.0
    %469 = vmatpush1.msra.mxu0 0.0
    %470 = vmatprep.subr.mxu0 0.0
    %471 = vmatpush1.msra.mxu0 0.0
    %472 = vmatprep.subr.mxu0 0.0
    %473 = vmatpush1.msra.mxu0 0.0
    %474 = vmatprep.subr.mxu0 0.0
    %475 = vmatpush1.msra.mxu0 0.0
    %476 = vmatprep.subr.mxu0 0.0
    %477 = vmatpush1.msra.mxu0 0.0
    %478 = vmatprep.subr.mxu0 0.0
    %479 = vmatpush1.msra.mxu0 0.0
    %480 = vmatprep.subr.mxu0 0.0
    %481 = vmatpush1.msra.mxu0 0.0
    %482 = vmatprep.subr.mxu0 0.0
    %483 = vmatpush1.msra.mxu0 0.0
    %484 = vmatprep.subr.mxu0 0.0
    %485 = vmatpush1.msra.mxu0 0.0
    %486 = vmatprep.subr.mxu0 0.0
    %487 = vmatpush1.msra.mxu0 0.0
    %488 = vmatprep.mubr.f32.mxu0 0.0
    %489 = vmatmul.mubr.f32.gmra.mrb[0].mxu0 %v411
    %v490 = vpop.f32.mrb[0].mxu0
    %v491 = vadd.f32 0.0, %v490
    %v492 = vpop.f32.mrb[0].mxu0
    %493 = vmatprep.mubr.f32.mxu0 0.0
    %494 = vmatmul.mubr.f32.gmra.mrb[0].mxu0 %v414
    %v495 = vpop.f32.mrb[0].mxu0
    %v496 = vadd.f32 0.0, %v495
    %v497 = vpop.f32.mrb[0].mxu0
    %498 = vmatprep.mubr.f32.mxu0 0.0
    %499 = vmatmul.mubr.f32.gmra.mrb[0].mxu0 %v417
    %v500 = vpop.f32.mrb[0].mxu0
    %v501 = vadd.f32 0.0, %v500
    %v502 = vpop.f32.mrb[0].mxu0
    %503 = vmatprep.mubr.f32.mxu0 0.0
    %504 = vmatmul.mubr.f32.gmra.mrb[0].mxu0 %v420
    %v505 = vpop.f32.mrb[0].mxu0
    %v506 = vadd.f32 0.0, %v505
    %v507 = vpop.f32.mrb[0].mxu0
    %508 = vdwg.mxu0
    %v509 = vld [vmem:[#allocation10] sm:$0xff]
    %v510 = vld [vmem:[#allocation10 + $0x8] sm:$0xff]
    %v511 = vld [vmem:[#allocation10 + $0x10] sm:$0xff]
    %v512 = vld [vmem:[#allocation10 + $0x18] sm:$0xff]
    %v513 = vmul.f32 %v347, %v509
    %v514 = vmul.f32 %v352, %v510
    %v515 = vmul.f32 %v357, %v511
    %v516 = vmul.f32 %v362, %v512
    %v517 = vmul.f32 %v491, %v509
    %v518 = vmul.f32 %v496, %v510
    %v519 = vmul.f32 %v501, %v511
    %v520 = vmul.f32 %v506, %v512
    %v521 = vsel %vm99, %v258, 0
    %v523 = vsel %vm99, %v181, 0
    %525 = vmatprep.subr.mxu0 0.0
    %526 = vmatpush1.msra.mxu0 %v513
    %527 = vmatprep.subr.mxu0 0.0
    %528 = vmatpush1.msra.mxu0 %v514
    %529 = vmatprep.subr.mxu0 0.0
    %530 = vmatpush1.msra.mxu0 %v515
    %531 = vmatprep.subr.mxu0 0.0
    %532 = vmatpush1.msra.mxu0 %v516
    %533 = vmatprep.subr.mxu0 0.0
    %534 = vmatpush1.msra.mxu0 0.0
    %535 = vmatprep.subr.mxu0 0.0
    %536 = vmatpush1.msra.mxu0 0.0
    %537 = vmatprep.subr.mxu0 0.0
    %538 = vmatpush1.msra.mxu0 0.0
    %539 = vmatprep.subr.mxu0 0.0
    %540 = vmatpush1.msra.mxu0 0.0
    %541 = vmatprep.subr.mxu0 0.0
    %542 = vmatpush1.msra.mxu0 0.0
    %543 = vmatprep.subr.mxu0 0.0
    %544 = vmatpush1.msra.mxu0 0.0
    %545 = vmatprep.subr.mxu0 0.0
    %546 = vmatpush1.msra.mxu0 0.0
    %547 = vmatprep.subr.mxu0 0.0
    %548 = vmatpush1.msra.mxu0 0.0
    %549 = vmatprep.subr.mxu0 0.0
    %550 = vmatpush1.msra.mxu0 0.0
    %551 = vmatprep.subr.mxu0 0.0
    %552 = vmatpush1.msra.mxu0 0.0
    %553 = vmatprep.subr.mxu0 0.0
    %554 = vmatpush1.msra.mxu0 0.0
    %555 = vmatprep.subr.mxu0 0.0
    %556 = vmatpush1.msra.mxu0 0.0
    %557 = vmatprep.subr.mxu0 0.0
    %558 = vmatpush1.msra.mxu0 0.0
    %559 = vmatprep.subr.mxu0 0.0
    %560 = vmatpush1.msra.mxu0 0.0
    %561 = vmatprep.subr.mxu0 0.0
    %562 = vmatpush1.msra.mxu0 0.0
    %563 = vmatprep.subr.mxu0 0.0
    %564 = vmatpush1.msra.mxu0 0.0
    %565 = vmatprep.subr.mxu0 0.0
    %566 = vmatpush1.msra.mxu0 0.0
    %567 = vmatprep.subr.mxu0 0.0
    %568 = vmatpush1.msra.mxu0 0.0
    %569 = vmatprep.subr.mxu0 0.0
    %570 = vmatpush1.msra.mxu0 0.0
    %571 = vmatprep.subr.mxu0 0.0
    %572 = vmatpush1.msra.mxu0 0.0
    %573 = vmatprep.subr.mxu0 0.0
    %574 = vmatpush1.msra.mxu0 0.0
    %575 = vmatprep.subr.mxu0 0.0
    %576 = vmatpush1.msra.mxu0 0.0
    %577 = vmatprep.subr.mxu0 0.0
    %578 = vmatpush1.msra.mxu0 0.0
    %579 = vmatprep.subr.mxu0 0.0
    %580 = vmatpush1.msra.mxu0 0.0
    %581 = vmatprep.subr.mxu0 0.0
    %582 = vmatpush1.msra.mxu0 0.0
    %583 = vmatprep.subr.mxu0 0.0
    %584 = vmatpush1.msra.mxu0 0.0
    %585 = vmatprep.subr.mxu0 0.0
    %586 = vmatpush1.msra.mxu0 0.0
    %587 = vmatprep.subr.mxu0 0.0
    %588 = vmatpush1.msra.mxu0 0.0
    %589 = vmatprep.mubr.f32.mxu0 0.0
    %590 = vmatmul.mubr.f32.gmra.mrb[0].mxu0 %v521
    %v591 = vpop.f32.mrb[0].mxu0
    %v592 = vadd.f32 0.0, %v591
    %v593 = vpop.f32.mrb[0].mxu0
    %594 = vmatprep.mubr.f32.mxu0 0.0
    %595 = vmatmul.mubr.f32.gmra.mrb[0].mxu0 %v523
    %v596 = vpop.f32.mrb[0].mxu0
    %v597 = vadd.f32 0.0, %v596
    %v598 = vpop.f32.mrb[0].mxu0
    %599 = vdwg.mxu0
    %v600 = vsel %vm99, %v404, 0
    %v602 = vsel %vm99, %v212, 0
    %604 = vmatprep.subr.mxu0 0.0
    %605 = vmatpush1.msra.mxu0 %v517
    %606 = vmatprep.subr.mxu0 0.0
    %607 = vmatpush1.msra.mxu0 %v518
    %608 = vmatprep.subr.mxu0 0.0
    %609 = vmatpush1.msra.mxu0 %v519
    %610 = vmatprep.subr.mxu0 0.0
    %611 = vmatpush1.msra.mxu0 %v520
    %612 = vmatprep.subr.mxu0 0.0
    %613 = vmatpush1.msra.mxu0 0.0
    %614 = vmatprep.subr.mxu0 0.0
    %615 = vmatpush1.msra.mxu0 0.0
    %616 = vmatprep.subr.mxu0 0.0
    %617 = vmatpush1.msra.mxu0 0.0
    %618 = vmatprep.subr.mxu0 0.0
    %619 = vmatpush1.msra.mxu0 0.0
    %620 = vmatprep.subr.mxu0 0.0
    %621 = vmatpush1.msra.mxu0 0.0
    %622 = vmatprep.subr.mxu0 0.0
    %623 = vmatpush1.msra.mxu0 0.0
    %624 = vmatprep.subr.mxu0 0.0
    %625 = vmatpush1.msra.mxu0 0.0
    %626 = vmatprep.subr.mxu0 0.0
    %627 = vmatpush1.msra.mxu0 0.0
    %628 = vmatprep.subr.mxu0 0.0
    %629 = vmatpush1.msra.mxu0 0.0
    %630 = vmatprep.subr.mxu0 0.0
    %631 = vmatpush1.msra.mxu0 0.0
    %632 = vmatprep.subr.mxu0 0.0
    %633 = vmatpush1.msra.mxu0 0.0
    %634 = vmatprep.subr.mxu0 0.0
    %635 = vmatpush1.msra.mxu0 0.0
    %636 = vmatprep.subr.mxu0 0.0
    %637 = vmatpush1.msra.mxu0 0.0
    %638 = vmatprep.subr.mxu0 0.0
    %639 = vmatpush1.msra.mxu0 0.0
    %640 = vmatprep.subr.mxu0 0.0
    %641 = vmatpush1.msra.mxu0 0.0
    %642 = vmatprep.subr.mxu0 0.0
    %643 = vmatpush1.msra.mxu0 0.0
    %644 = vmatprep.subr.mxu0 0.0
    %645 = vmatpush1.msra.mxu0 0.0
    %646 = vmatprep.subr.mxu0 0.0
    %647 = vmatpush1.msra.mxu0 0.0
    %648 = vmatprep.subr.mxu0 0.0
    %649 = vmatpush1.msra.mxu0 0.0
    %650 = vmatprep.subr.mxu0 0.0
    %651 = vmatpush1.msra.mxu0 0.0
    %652 = vmatprep.subr.mxu0 0.0
    %653 = vmatpush1.msra.mxu0 0.0
    %654 = vmatprep.subr.mxu0 0.0
    %655 = vmatpush1.msra.mxu0 0.0
    %656 = vmatprep.subr.mxu0 0.0
    %657 = vmatpush1.msra.mxu0 0.0
    %658 = vmatprep.subr.mxu0 0.0
    %659 = vmatpush1.msra.mxu0 0.0
    %660 = vmatprep.subr.mxu0 0.0
    %661 = vmatpush1.msra.mxu0 0.0
    %662 = vmatprep.subr.mxu0 0.0
    %663 = vmatpush1.msra.mxu0 0.0
    %664 = vmatprep.subr.mxu0 0.0
    %665 = vmatpush1.msra.mxu0 0.0
    %666 = vmatprep.subr.mxu0 0.0
    %667 = vmatpush1.msra.mxu0 0.0
    %668 = vmatprep.mubr.f32.mxu0 0.0
    %669 = vmatmul.mubr.f32.gmra.mrb[0].mxu0 %v600
    %v670 = vpop.f32.mrb[0].mxu0
    %v671 = vadd.f32 0.0, %v670
    %v672 = vpop.f32.mrb[0].mxu0
    %673 = vmatprep.mubr.f32.mxu0 0.0
    %674 = vmatmul.mubr.f32.gmra.mrb[0].mxu0 %v602
    %v675 = vpop.f32.mrb[0].mxu0
    %v676 = vadd.f32 0.0, %v675
    %v677 = vpop.f32.mrb[0].mxu0
    %678 = vdwg.mxu0
    %v683 = vcombine.high %v592, %v592
    %v684 = vcombine.high %v671, %v671
    %v685 = vld [vmem:[#allocation8] sm:$0xff]
    %v686 = vld [vmem:[#allocation8 + $0x8] sm:$0xff]
    %v687 = vld [vmem:[#allocation8 + $0x10] sm:$0xff]
    %v688 = vld [vmem:[#allocation8 + $0x18] sm:$0xff]
    %v689 = vcombine.low %v592, %v683
    %v690 = vcombine.low %v597, %v671
    %v691 = vcombine.low %v684, %v676
    %v692 = vsel %vm99, %v689, 0
    %v694 = vsel %vm99, %v690, 0
    %v696 = vsel %vm99, %v691, 0
    %698 = vmatprep.subr.mxu0 0.0
    %699 = vmatpush1.msra.mxu0 %v685
    %700 = vmatprep.subr.mxu0 0.0
    %701 = vmatpush1.msra.mxu0 %v686
    %702 = vmatprep.subr.mxu0 0.0
    %703 = vmatpush1.msra.mxu0 %v687
    %704 = vmatprep.subr.mxu0 0.0
    %705 = vmatpush1.msra.mxu0 %v688
    %706 = vmatprep.subr.mxu0 0.0
    %707 = vmatpush1.msra.mxu0 0.0
    %708 = vmatprep.subr.mxu0 0.0
    %709 = vmatpush1.msra.mxu0 0.0
    %710 = vmatprep.subr.mxu0 0.0
    %711 = vmatpush1.msra.mxu0 0.0
    %712 = vmatprep.subr.mxu0 0.0
    %713 = vmatpush1.msra.mxu0 0.0
    %714 = vmatprep.subr.mxu0 0.0
    %715 = vmatpush1.msra.mxu0 0.0
    %716 = vmatprep.subr.mxu0 0.0
    %717 = vmatpush1.msra.mxu0 0.0
    %718 = vmatprep.subr.mxu0 0.0
    %719 = vmatpush1.msra.mxu0 0.0
    %720 = vmatprep.subr.mxu0 0.0
    %721 = vmatpush1.msra.mxu0 0.0
    %722 = vmatprep.subr.mxu0 0.0
    %723 = vmatpush1.msra.mxu0 0.0
    %724 = vmatprep.subr.mxu0 0.0
    %725 = vmatpush1.msra.mxu0 0.0
    %726 = vmatprep.subr.mxu0 0.0
    %727 = vmatpush1.msra.mxu0 0.0
    %728 = vmatprep.subr.mxu0 0.0
    %729 = vmatpush1.msra.mxu0 0.0
    %730 = vmatprep.subr.mxu0 0.0
    %731 = vmatpush1.msra.mxu0 0.0
    %732 = vmatprep.subr.mxu0 0.0
    %733 = vmatpush1.msra.mxu0 0.0
    %734 = vmatprep.subr.mxu0 0.0
    %735 = vmatpush1.msra.mxu0 0.0
    %736 = vmatprep.subr.mxu0 0.0
    %737 = vmatpush1.msra.mxu0 0.0
    %738 = vmatprep.subr.mxu0 0.0
    %739 = vmatpush1.msra.mxu0 0.0
    %740 = vmatprep.subr.mxu0 0.0
    %741 = vmatpush1.msra.mxu0 0.0
    %742 = vmatprep.subr.mxu0 0.0
    %743 = vmatpush1.msra.mxu0 0.0
    %744 = vmatprep.subr.mxu0 0.0
    %745 = vmatpush1.msra.mxu0 0.0
    %746 = vmatprep.subr.mxu0 0.0
    %747 = vmatpush1.msra.mxu0 0.0
    %748 = vmatprep.subr.mxu0 0.0
    %749 = vmatpush1.msra.mxu0 0.0
    %750 = vmatprep.subr.mxu0 0.0
    %751 = vmatpush1.msra.mxu0 0.0
    %752 = vmatprep.subr.mxu0 0.0
    %753 = vmatpush1.msra.mxu0 0.0
    %754 = vmatprep.subr.mxu0 0.0
    %755 = vmatpush1.msra.mxu0 0.0
    %756 = vmatprep.subr.mxu0 0.0
    %757 = vmatpush1.msra.mxu0 0.0
    %758 = vmatprep.subr.mxu0 0.0
    %759 = vmatpush1.msra.mxu0 0.0
    %760 = vmatprep.subr.mxu0 0.0
    %761 = vmatpush1.msra.mxu0 0.0
    %762 = vmatprep.mubr.f32.mxu0 0.0
    %763 = vmatmul.mubr.f32.gmra.mrb[0].mxu0 %v692
    %v764 = vpop.f32.mrb[0].mxu0
    %v765 = vadd.f32 0.0, %v764
    %v766 = vpop.f32.mrb[0].mxu0
    %767 = vmatprep.mubr.f32.mxu0 0.0
    %768 = vmatmul.mubr.f32.gmra.mrb[0].mxu0 %v694
    %v769 = vpop.f32.mrb[0].mxu0
    %v770 = vadd.f32 0.0, %v769
    %v771 = vpop.f32.mrb[0].mxu0
    %772 = vmatprep.mubr.f32.mxu0 0.0
    %773 = vmatmul.mubr.f32.gmra.mrb[0].mxu0 %v696
    %v774 = vpop.f32.mrb[0].mxu0
    %v775 = vadd.f32 0.0, %v774
    %v776 = vpop.f32.mrb[0].mxu0
    %777 = vdwg.mxu0
    %781 = vrot.lane.b32.xlu0 %v765, 64
    %v782 = vpop.permute.xlu0 %781
    %783 = vrot.lane.b32.xlu0 %v770, 64
    %v784 = vpop.permute.xlu0 %783
    %785 = vrot.lane.b32.xlu0 %v775, 64
    %v786 = vpop.permute.xlu0 %785
    %v790 = vadd.f32 %v176, %v782
    %v791 = vadd.f32 %v181, %v784
    %v792 = vadd.f32 %v186, %v786
    %v793 = vxor.u32 %v790, 2147483648
    %v794 = vxor.u32 %v791, 2147483648
    %v795 = vxor.u32 %v792, 2147483648
    %v796 = vmul.f32 %v793, 1.442695
    %v797 = vpow.pop %v796
    %v798 = vmul.f32 %v794, 1.442695
    %v799 = vpow.pop %v798
    %v800 = vmul.f32 %v795, 1.442695
    %v801 = vpow.pop %v800
    %v802 = vadd.f32 %v797, 1.0
    %v803 = vadd.f32 %v799, 1.0
    %v804 = vadd.f32 %v801, 1.0
    %v805 = vrcp.pop %v802
    %v806 = vmul.f32 1.0, %v805
    %v807 = vrcp.pop %v803
    %v808 = vmul.f32 1.0, %v807
    %v809 = vrcp.pop %v804
    %v810 = vmul.f32 1.0, %v809
    %v811 = vmul.f32 %v806, 2.0
    %v812 = vmul.f32 %v808, 2.0
    %v813 = vmul.f32 %v810, 2.0
    %v814 = vsub.f32 %v811, 1.0
    %v815 = vsub.f32 %v812, 1.0
    %v816 = vsub.f32 %v813, 1.0
    %818 = vset.pattern.permute.xlu0 96
    %819 = vperm.xlu0 %818, %v814
    %v820 = vpop.permute.xlu0 %819
    %823 = vset.pattern.permute.xlu0 96
    %824 = vperm.xlu0 %823, %v815
    %v825 = vpop.permute.xlu0 %824
    %828 = vset.pattern.permute.xlu0 96
    %829 = vperm.xlu0 %828, %v816
    %v830 = vpop.permute.xlu0 %829
    %v832 = vmul.f32 %v820, %v89
    %v833 = vmul.f32 %v825, %v90
    %v834 = vmul.f32 %v830, %v91
    %835 = vset.pattern.permute.xlu0 97
    %836 = vperm.xlu0 %835, %v814
    %v837 = vpop.permute.xlu0 %836
    %839 = vset.pattern.permute.xlu0 97
    %840 = vperm.xlu0 %839, %v815
    %v841 = vpop.permute.xlu0 %840
    %843 = vset.pattern.permute.xlu0 97
    %844 = vperm.xlu0 %843, %v816
    %v845 = vpop.permute.xlu0 %844
    %v847 = vmul.f32 %v837, %v765
    %v848 = vmul.f32 %v841, %v770
    %v849 = vmul.f32 %v845, %v775
    %v850 = vadd.f32 %v832, %v847
    %v851 = vadd.f32 %v833, %v848
    %v852 = vadd.f32 %v834, %v849
    %853 = vst.msk [vmem:[#allocation11] sm:$0xff] %vm99, %v850
    %854 = vst.msk [vmem:[#allocation11 + $0x8] sm:$0xff] %vm99, %v851
    %855 = vst.msk [vmem:[#allocation11 + $0x10] sm:$0xff] %vm99, %v852
    // Predicated region
    $region42: #{tpu_custom_call.1} parent=1 // pred_check
      _
    $region43: #{tpu_custom_call.1} parent=1 // pred_check_branch
      %857 = sbr.rel (0) target = $region45
    $region44: #{tpu_custom_call.1} parent=1 // pred_region
      %s859 = ssub.s32 384, 384
      %860 = vsyncadd [#allocation4], %s859
      %s861 = sshll.u32 [#allocation11], 4
      %s862 = int_to_ptr.vmem [resolvable:$true] %s861
      %867 = dma.vmem_to_hbm [thread:$0]  %s862, 384, %s5, [#allocation4], 128, 128, 8
    $region45: #{tpu_custom_call.1} parent=1 // pred_fallthru
      _
    // Predicated region
    $region46: #{tpu_custom_call.1} parent=1 // pred_check
      _
    $region47: #{tpu_custom_call.1} parent=1 // pred_check_branch
      %869 = sbr.rel (0) target = $region49
    $region48: #{tpu_custom_call.1} parent=1 // pred_region
      %870 = dma.done [#allocation4], 384
    $region49: #{tpu_custom_call.1} parent=1 // pred_fallthru
      _
    %871 = vsyncpa [#allocation3], 1
    %872 = vsyncpa [#allocation6], 1
    %873 = vsyncpa [#allocation9], 1
    %874 = vsyncpa [#allocation4], 1

</llo_original>
